<compile_context>
chip_gen: v7x
topology: tpu7x:2x2x1
jax: 0.10.0
libtpu: 0.0.40
codegen_flags: <defaults>
</compile_context>

<pallas_src>
import functools

import jax
import jax.numpy as jnp
from jax.experimental import pallas as pl
from jax.experimental.pallas import tpu as pltpu

HEAD_PAD = 128  # lane-dense padded width of the fused [mu|var] head


def actor_kernel(x_ref, w0_ref, w1_ref, wh_ref, b_ref, out_ref,
                 *, h0, h1, n_act, mxu_dtype):
    """One batch tile; all (small) parameters resident in VMEM.

    b_ref holds the three bias rows zero-padded to a common width W=128:
      row 0 -> b0[:h0], row 1 -> b1[:h1], row 2 -> [bmu | bvar | 0...] (128)
    wh_ref is [Wmu | Wvar | 0...] : (h1, 128).
    """
    x = x_ref[...]                                   # (tb, d_in) f32
    ball = b_ref[...]                                # (3, 128)   f32
    b0 = ball[0:1, :h0]
    b1 = ball[1:2, :h1]
    bh = ball[2:3, :]                                # full padded head bias

    target = jnp.dtype(mxu_dtype)

    def mxu(a):
        # No-op on the default f32 path (no extra VALU pack passes on v5e).
        return a if a.dtype == target else a.astype(target)

    # Hidden layer 1: f32 accumulate on the MXU, bias + ReLU in f32 on the VPU.
    h = jnp.dot(mxu(x), w0_ref[...],
                preferred_element_type=jnp.float32) + b0
    h = jnp.maximum(h, 0.0)

    # Hidden layer 2.
    h = jnp.dot(mxu(h), w1_ref[...],
                preferred_element_type=jnp.float32) + b1
    h = jnp.maximum(h, 0.0)

    # Fused, lane-dense mu|var head: one matmul, one (tb, 128) result.
    y = jnp.dot(mxu(h), wh_ref[...],
                preferred_element_type=jnp.float32) + bh

    col = jax.lax.broadcasted_iota(jnp.int32, y.shape, 1)
    tanh_y = jnp.tanh(y)
    # Numerically stable softplus: max(y, 0) + log1p(exp(-|y|))
    softplus_y = jnp.maximum(y, 0.0) + jnp.log1p(jnp.exp(-jnp.abs(y)))
    # Unmasked full-lane store: lane-dense output slab.
    out_ref[...] = jnp.where(col < n_act, tanh_y, softplus_y)


def pack_params(params, *, mxu_dtype=jnp.float32):
    """Fuse the two heads (zero-padded to 128 lanes) and pack the biases.

    Returns (w0, w1, wh_padded, b_packed, n_act).  Weights are optionally cast
    once to `mxu_dtype` (bf16 fast-MXU path on v6e/v7x); biases stay f32.
    """
    w0, b0, w1, b1, wmu, bmu, wvar, bvar = params
    n_act = wmu.shape[1]
    wh = jnp.concatenate([wmu, wvar], axis=1)                 # (h1, 2*n_act)
    wh = jnp.pad(wh, ((0, 0), (0, HEAD_PAD - wh.shape[1])))   # (h1, 128)
    bh = jnp.concatenate([bmu, bvar], axis=1)                 # (1, 2*n_act)
    W = max(w0.shape[1], w1.shape[1], HEAD_PAD)

    def pad(b):
        return jnp.pad(b.astype(jnp.float32), ((0, 0), (0, W - b.shape[1])))

    b_packed = jnp.concatenate([pad(b0), pad(b1), pad(bh)], axis=0)  # (3, W)
    return (w0.astype(mxu_dtype), w1.astype(mxu_dtype),
            wh.astype(mxu_dtype), b_packed, n_act)


def _round_up(x, m):
    return ((x + m - 1) // m) * m


def _pick_batch_tile(B):
    # Small batch: single step (block == full array dim, always legal).
    if B < 256:
        return B
    # >= 2 evenly balanced "parallel" steps (v7x megacore), capped at 4096
    # rows to stay trivially inside VMEM while amortizing per-step overhead.
    return min(4096, _round_up((B + 1) // 2, 8))


def actor_forward(state, packed_params, *, batch_tile=None):
    """Fused actor MLP. state: [B, d_in] float32. Returns (mu, var), both [B, n_act]."""
    w0, w1, wh, b_packed, n_act = packed_params
    B, d_in = state.shape
    h0 = w0.shape[1]
    h1 = w1.shape[1]
    head_w = wh.shape[1]                 # 128 (lane-dense)
    mxu_dtype = w0.dtype

    tb = _pick_batch_tile(B) if batch_tile is None else batch_tile
    grid = (pl.cdiv(B, tb),)

    # Constant-index full blocks for the (tiny) parameters: stay VMEM-resident.
    const = lambda shape: pl.BlockSpec(shape, lambda i: (0,) * len(shape))

    kernel = functools.partial(actor_kernel, h0=h0, h1=h1, n_act=n_act,
                               mxu_dtype=mxu_dtype)

    out = pl.pallas_call(
        kernel,
        out_shape=jax.ShapeDtypeStruct((B, head_w), jnp.float32),
        grid=grid,
        in_specs=[
            pl.BlockSpec((tb, d_in), lambda i: (i, 0)),   # state tile
            const(w0.shape),                              # input_layer weights
            const(w1.shape),                              # h1 weights
            const(wh.shape),                              # fused padded head
            const(b_packed.shape),                        # packed biases
        ],
        out_specs=pl.BlockSpec((tb, head_w), lambda i: (i, 0)),
        compiler_params=pltpu.CompilerParams(
            dimension_semantics=("parallel",)),
    )(state, w0, w1, wh, b_packed)

    return out[:, :n_act], out[:, n_act:2 * n_act]


def init_linear(key, fan_in, fan_out):
    """Mimics PyTorch nn.Linear default init (uniform +/- 1/sqrt(fan_in)).
    Returns W with shape (in, out) and bias with shape (1, out)."""
    kw, kb = jax.random.split(key)
    bound = 1.0 / jnp.sqrt(float(fan_in))
    w = jax.random.uniform(kw, (fan_in, fan_out), jnp.float32, -bound, bound)
    b = jax.random.uniform(kb, (1, fan_out), jnp.float32, -bound, bound)
    return w, b


def reference_forward(state, params):
    """Pure-JAX reference of the PyTorch forward."""
    w0, b0, w1, b1, wmu, bmu, wvar, bvar = params
    x = jnp.maximum(state @ w0 + b0, 0.0)
    x = jnp.maximum(x @ w1 + b1, 0.0)
    mu = jnp.tanh(x @ wmu + bmu)
    var = jax.nn.softplus(x @ wvar + bvar)
    return mu, var


if __name__ == "__main__":
    # Shapes consistent with the module: input_dims=(16,), layers=[64, 64], n_actions=4
    B, D_IN, H0, H1, N_ACT = 8, 16, 64, 64, 4

    key = jax.random.PRNGKey(0)
    k_state, k_big, k0, k1, k2, k3 = jax.random.split(key, 6)

    state = jax.random.normal(k_state, (B, D_IN), jnp.float32)

    w0, b0 = init_linear(k0, D_IN, H0)        # input_layer
    w1, b1 = init_linear(k1, H0, H1)          # h1
    wmu, bmu = init_linear(k2, H1, N_ACT)     # mu head
    wvar, bvar = init_linear(k3, H1, N_ACT)   # var head
    params = (w0, b0, w1, b1, wmu, bmu, wvar, bvar)

    # ---- exact f32 path (matches PyTorch semantics modulo f32 matmul order)
    packed_f32 = pack_params(params, mxu_dtype=jnp.float32)
    mu, var = actor_forward(state, packed_f32)
    jax.block_until_ready((mu, var))

    mu_ref, var_ref = reference_forward(state, params)
    assert mu.shape == (B, N_ACT) and var.shape == (B, N_ACT)
    assert jnp.allclose(mu, mu_ref, atol=1e-5, rtol=1e-5)
    assert jnp.allclose(var, var_ref, atol=1e-5, rtol=1e-5)
    assert bool(jnp.all(var > 0.0))          # softplus output strictly positive

    # ---- larger batch: 2 evenly balanced "parallel" grid steps (tb=512)
    big_state = jax.random.normal(k_big, (1024, D_IN), jnp.float32)
    mu_b, var_b = actor_forward(big_state, packed_f32)
    jax.block_until_ready((mu_b, var_b))
    mu_br, var_br = reference_forward(big_state, params)
    assert jnp.allclose(mu_b, mu_br, atol=1e-5, rtol=1e-5)
    assert jnp.allclose(var_b, var_br, atol=1e-5, rtol=1e-5)

    # ---- opt-in bf16 MXU-operand path (v6e / v7x); f32 accumulate + elementwise
    packed_bf16 = pack_params(params, mxu_dtype=jnp.bfloat16)
    mu16, var16 = actor_forward(state, packed_bf16)
    jax.block_until_ready((mu16, var16))
    assert jnp.allclose(mu16, mu_ref, atol=5e-2, rtol=5e-2)
    assert jnp.allclose(var16, var_ref, atol=5e-2, rtol=5e-2)

    print("KERNEL_OK")
</pallas_src>

<mosaic_0001>
module attributes {stable_mosaic.version = 11 : i64} {
  func.func @actor_kernel(%arg0: i32, %arg1: memref<8x16xf32, #tpu.memory_space<vmem>>, %arg2: memref<16x64xf32, #tpu.memory_space<vmem>>, %arg3: memref<64x64xf32, #tpu.memory_space<vmem>>, %arg4: memref<64x128xf32, #tpu.memory_space<vmem>>, %arg5: memref<3x128xf32, #tpu.memory_space<vmem>>, %arg6: memref<8x128xf32, #tpu.memory_space<vmem>>) attributes {dimension_semantics = [#tpu.dimension_semantics<parallel>], iteration_bounds = array<i64: 1>, scalar_prefetch = 0 : i64, scratch_operands = 0 : i64, tpu.core_type = #tpu.core_type<tc>, window_params = [{transform_indices = @transform_0, window_bounds = array<i64: 8, 16>}, {pipeline_mode = #tpu.pipeline_mode<synchronous>, transform_indices = @transform_1, window_bounds = array<i64: 16, 64>}, {pipeline_mode = #tpu.pipeline_mode<synchronous>, transform_indices = @transform_2, window_bounds = array<i64: 64, 64>}, {pipeline_mode = #tpu.pipeline_mode<synchronous>, transform_indices = @transform_3, window_bounds = array<i64: 64, 128>}, {pipeline_mode = #tpu.pipeline_mode<synchronous>, transform_indices = @transform_4, window_bounds = array<i64: 3, 128>}, {transform_indices = @transform_5, window_bounds = array<i64: 8, 128>}]} {
    %c0 = arith.constant 0 : index
    %c0_0 = arith.constant 0 : index
    %0 = vector.load %arg1[%c0, %c0_0] : memref<8x16xf32, #tpu.memory_space<vmem>>, vector<8x16xf32>
    %c0_1 = arith.constant 0 : index
    %c0_2 = arith.constant 0 : index
    %1 = vector.load %arg5[%c0_1, %c0_2] : memref<3x128xf32, #tpu.memory_space<vmem>>, vector<3x128xf32>
    %2 = vector.extract_strided_slice %1 {offsets = [0, 0], sizes = [1, 64], strides = [1, 1]} : vector<3x128xf32> to vector<1x64xf32>
    %3 = vector.extract_strided_slice %1 {offsets = [1, 0], sizes = [1, 64], strides = [1, 1]} : vector<3x128xf32> to vector<1x64xf32>
    %4 = vector.extract_strided_slice %1 {offsets = [2, 0], sizes = [1, 128], strides = [1, 1]} : vector<3x128xf32> to vector<1x128xf32>
    %c0_3 = arith.constant 0 : index
    %c0_4 = arith.constant 0 : index
    %5 = vector.load %arg2[%c0_3, %c0_4] : memref<16x64xf32, #tpu.memory_space<vmem>>, vector<16x64xf32>
    %cst = arith.constant dense<0.000000e+00> : vector<8x64xf32>
    %6 = tpu.matmul %0, %5, %cst {dimension_numbers = #tpu.dot_dimension_numbers<[1], [0], [0], [1], [0, 0, 1, 1], [], []>} : vector<8x16xf32>, vector<16x64xf32>, vector<8x64xf32> -> vector<8x64xf32>
    %7 = vector.broadcast %2 : vector<1x64xf32> to vector<8x64xf32>
    %8 = arith.addf %6, %7 : vector<8x64xf32>
    %cst_5 = arith.constant 0.000000e+00 : f32
    %9 = vector.broadcast %cst_5 : f32 to vector<8x64xf32>
    %10 = arith.maximumf %8, %9 : vector<8x64xf32>
    %c0_6 = arith.constant 0 : index
    %c0_7 = arith.constant 0 : index
    %11 = vector.load %arg3[%c0_6, %c0_7] : memref<64x64xf32, #tpu.memory_space<vmem>>, vector<64x64xf32>
    %cst_8 = arith.constant dense<0.000000e+00> : vector<8x64xf32>
    %12 = tpu.matmul %10, %11, %cst_8 {dimension_numbers = #tpu.dot_dimension_numbers<[1], [0], [0], [1], [0, 0, 1, 1], [], []>} : vector<8x64xf32>, vector<64x64xf32>, vector<8x64xf32> -> vector<8x64xf32>
    %13 = vector.broadcast %3 : vector<1x64xf32> to vector<8x64xf32>
    %14 = arith.addf %12, %13 : vector<8x64xf32>
    %cst_9 = arith.constant 0.000000e+00 : f32
    %15 = vector.broadcast %cst_9 : f32 to vector<8x64xf32>
    %16 = arith.maximumf %14, %15 : vector<8x64xf32>
    %c0_10 = arith.constant 0 : index
    %c0_11 = arith.constant 0 : index
    %17 = vector.load %arg4[%c0_10, %c0_11] : memref<64x128xf32, #tpu.memory_space<vmem>>, vector<64x128xf32>
    %cst_12 = arith.constant dense<0.000000e+00> : vector<8x128xf32>
    %18 = tpu.matmul %16, %17, %cst_12 {dimension_numbers = #tpu.dot_dimension_numbers<[1], [0], [0], [1], [0, 0, 1, 1], [], []>} : vector<8x64xf32>, vector<64x128xf32>, vector<8x128xf32> -> vector<8x128xf32>
    %19 = vector.broadcast %4 : vector<1x128xf32> to vector<8x128xf32>
    %20 = arith.addf %18, %19 : vector<8x128xf32>
    %21 = tpu.iota {dimensions = array<i32: 1>} : vector<8x128xi32>
    %22 = math.tanh %20 : vector<8x128xf32>
    %cst_13 = arith.constant 0.000000e+00 : f32
    %23 = vector.broadcast %cst_13 : f32 to vector<8x128xf32>
    %24 = arith.maximumf %20, %23 : vector<8x128xf32>
    %25 = math.absf %20 : vector<8x128xf32>
    %cst_14 = arith.constant 0.000000e+00 : f32
    %26 = vector.broadcast %cst_14 : f32 to vector<8x128xf32>
    %27 = arith.subf %26, %25 : vector<8x128xf32>
    %28 = math.exp %27 : vector<8x128xf32>
    %29 = math.log1p %28 : vector<8x128xf32>
    %30 = arith.addf %24, %29 : vector<8x128xf32>
    %c4_i32 = arith.constant 4 : i32
    %31 = vector.broadcast %c4_i32 : i32 to vector<8x128xi32>
    %32 = arith.cmpi slt, %21, %31 : vector<8x128xi32>
    %33 = arith.select %32, %22, %30 : vector<8x128xi1>, vector<8x128xf32>
    %c0_15 = arith.constant 0 : index
    %c0_16 = arith.constant 0 : index
    %34 = vector.load %arg6[%c0_15, %c0_16] : memref<8x128xf32, #tpu.memory_space<vmem>>, vector<8x128xf32>
    tpu.vector_store %arg6[%c0_15, %c0_16], %33 {strides = array<i32>} : memref<8x128xf32, #tpu.memory_space<vmem>>, vector<8x128xf32>,
    return
  }
  func.func @transform_0(%arg0: i32) -> (i32, i32) {
    %c0_i32 = arith.constant 0 : i32
    %c0_i32_0 = arith.constant 0 : i32
    return %arg0, %c0_i32 : i32, i32
  }
  func.func @transform_1(%arg0: i32) -> (i32, i32) {
    %c0_i32 = arith.constant 0 : i32
    %c0_i32_0 = arith.constant 0 : i32
    %c0_i32_1 = arith.constant 0 : i32
    return %c0_i32, %c0_i32_0 : i32, i32
  }
  func.func @transform_2(%arg0: i32) -> (i32, i32) {
    %c0_i32 = arith.constant 0 : i32
    %c0_i32_0 = arith.constant 0 : i32
    %c0_i32_1 = arith.constant 0 : i32
    return %c0_i32, %c0_i32_0 : i32, i32
  }
  func.func @transform_3(%arg0: i32) -> (i32, i32) {
    %c0_i32 = arith.constant 0 : i32
    %c0_i32_0 = arith.constant 0 : i32
    %c0_i32_1 = arith.constant 0 : i32
    return %c0_i32, %c0_i32_0 : i32, i32
  }
  func.func @transform_4(%arg0: i32) -> (i32, i32) {
    %c0_i32 = arith.constant 0 : i32
    %c0_i32_0 = arith.constant 0 : i32
    %c0_i32_1 = arith.constant 0 : i32
    return %c0_i32, %c0_i32_0 : i32, i32
  }
  func.func @transform_5(%arg0: i32) -> (i32, i32) {
    %c0_i32 = arith.constant 0 : i32
    %c0_i32_0 = arith.constant 0 : i32
    return %arg0, %c0_i32 : i32, i32
  }
}

</mosaic_0001>

<llo_original>
// kernel: tpu_custom_call.1
$region0: #{tpu_custom_call.1}
  #allocation0 [shape = 'u32[]', space=smem, size = 0x4, offset = 0x4, fixed_abs, tag = 'smem constant byte address 0x4 - core index']
  #allocation1 [shape = 'u32[144,128]{1,0:T(1,128)}', space=vmem, size = 0x12000, scoped, tag = 'internal scratch']
  %s0 = inlined_call_operand.hbm [shape: f32[8,16], index: 0, kind: input, shape index: {}]
  %s1 = inlined_call_operand.hbm [shape: f32[16,64], index: 1, kind: input, shape index: {}]
  %s2 = inlined_call_operand.hbm [shape: f32[64,64], index: 2, kind: input, shape index: {}]
  %s3 = inlined_call_operand.hbm [shape: f32[64,128], index: 3, kind: input, shape index: {}]
  %s4 = inlined_call_operand.vmem [shape: f32[3,128], index: 4, kind: input, shape index: {}]
  %s5 = inlined_call_operand.hbm [shape: f32[8,128], index: 5, kind: output, shape index: {}]
  %s6 = sld [smem:[#allocation0]]
  $region46: #{tpu_custom_call.1} parent=0
    _
  %s8 = ssub.s32 1, %s6
  %s9 = scalar_select 0, %s8, %s6
  $region1: #{tpu_custom_call.1} parent=0
    #allocation2 [shape = 'u8[4096]{0}', space=vmem, size = 0x1000, scoped, tag = 'input window, operand 0, single buffered']
    #allocation3 [shape = 's32[1]{0}', space=sflag, size = 0x4, scoped, tag = 'scoped memory for tpu_custom_call.1']
    #allocation4 [shape = 's32[1]{0}', space=sflag, size = 0x4, scoped, tag = 'scoped memory for tpu_custom_call.1']
    #allocation5 [shape = 'u8[8192]{0}', space=vmem, size = 0x2000, scoped, tag = 'input window, operand 1, single buffered']
    #allocation6 [shape = 's32[1]{0}', space=sflag, size = 0x4, scoped, tag = 'scoped memory for tpu_custom_call.1']
    #allocation7 [shape = 'u8[32768]{0}', space=vmem, size = 0x8000, scoped, tag = 'input window, operand 2, single buffered']
    #allocation8 [shape = 'u8[32768]{0}', space=vmem, size = 0x8000, scoped, tag = 'input window, operand 3, single buffered']
    #allocation9 [shape = 's32[1]{0}', space=sflag, size = 0x4, scoped, tag = 'scoped memory for tpu_custom_call.1']
    #allocation10 [shape = 'u8[4096]{0}', space=vmem, size = 0x1000, scoped, tag = 'output window, operand 0, single buffered']
    %10 = vsyncpa [#allocation3], 0
    %11 = vsyncpa [#allocation6], 0
    %12 = vsyncpa [#allocation9], 0
    %13 = vsyncpa [#allocation4], 0
    // Predicated region
    $region2: #{tpu_custom_call.1} parent=1 // pred_check
      _
    $region3: #{tpu_custom_call.1} parent=1 // pred_check_branch
      %15 = sbr.rel (0) target = $region5
    $region4: #{tpu_custom_call.1} parent=1 // pred_region
      %s17 = ssub.s32 128, 128
      %18 = vsyncadd [#allocation3], %s17
      %s20 = sshll.u32 [#allocation2], 4
      %s21 = int_to_ptr.vmem [resolvable:$true] %s20
      %23 = dma.hbm_to_vmem [thread:$0]  %s0, 128, %s21, [#allocation3]
    $region5: #{tpu_custom_call.1} parent=1 // pred_fallthru
      _
    // Predicated region
    $region6: #{tpu_custom_call.1} parent=1 // pred_check
      _
    $region7: #{tpu_custom_call.1} parent=1 // pred_check_branch
      %25 = sbr.rel (0) target = $region9
    $region8: #{tpu_custom_call.1} parent=1 // pred_region
      %s27 = ssub.s32 256, 256
      %28 = vsyncadd [#allocation6], %s27
      %s29 = sshll.u32 [#allocation5], 4
      %s30 = int_to_ptr.vmem [resolvable:$true] %s29
      %35 = dma.hbm_to_vmem [thread:$0]  %s1, 256, %s30, [#allocation6], 128, 128, 8
    $region9: #{tpu_custom_call.1} parent=1 // pred_fallthru
      _
    // Predicated region
    $region10: #{tpu_custom_call.1} parent=1 // pred_check
      _
    $region11: #{tpu_custom_call.1} parent=1 // pred_check_branch
      %37 = sbr.rel (0) target = $region13
    $region12: #{tpu_custom_call.1} parent=1 // pred_region
      %s39 = ssub.s32 1024, 1024
      %40 = vsyncadd [#allocation6], %s39
      %s41 = sshll.u32 [#allocation7], 4
      %s42 = int_to_ptr.vmem [resolvable:$true] %s41
      %47 = dma.hbm_to_vmem [thread:$0]  %s2, 1024, %s42, [#allocation6], 128, 128, 8
    $region13: #{tpu_custom_call.1} parent=1 // pred_fallthru
      _
    // Predicated region
    $region14: #{tpu_custom_call.1} parent=1 // pred_check
      _
    $region15: #{tpu_custom_call.1} parent=1 // pred_check_branch
      %49 = sbr.rel (0) target = $region17
    $region16: #{tpu_custom_call.1} parent=1 // pred_region
      %s51 = ssub.s32 1024, 1024
      %52 = vsyncadd [#allocation9], %s51
      %s53 = sshll.u32 [#allocation8], 4
      %s54 = int_to_ptr.vmem [resolvable:$true] %s53
      %59 = dma.hbm_to_vmem [thread:$0]  %s3, 1024, %s54, [#allocation9], 128, 128, 8
    $region17: #{tpu_custom_call.1} parent=1 // pred_fallthru
      _
    // Predicated region
    $region18: #{tpu_custom_call.1} parent=1 // pred_check
      _
    $region19: #{tpu_custom_call.1} parent=1 // pred_check_branch
      %61 = sbr.rel (0) target = $region21
    $region20: #{tpu_custom_call.1} parent=1 // pred_region
      _
    $region21: #{tpu_custom_call.1} parent=1 // pred_fallthru
      _
    // Predicated region
    $region22: #{tpu_custom_call.1} parent=1 // pred_check
      _
    $region23: #{tpu_custom_call.1} parent=1 // pred_check_branch
      %63 = sbr.rel (0) target = $region25
    $region24: #{tpu_custom_call.1} parent=1 // pred_region
      %64 = dma.done [#allocation3], 128
    $region25: #{tpu_custom_call.1} parent=1 // pred_fallthru
      _
    // Predicated region
    $region26: #{tpu_custom_call.1} parent=1 // pred_check
      _
    $region27: #{tpu_custom_call.1} parent=1 // pred_check_branch
      %66 = sbr.rel (0) target = $region29
    $region28: #{tpu_custom_call.1} parent=1 // pred_region
      %67 = dma.done [#allocation6], 256
    $region29: #{tpu_custom_call.1} parent=1 // pred_fallthru
      _
    // Predicated region
    $region30: #{tpu_custom_call.1} parent=1 // pred_check
      _
    $region31: #{tpu_custom_call.1} parent=1 // pred_check_branch
      %69 = sbr.rel (0) target = $region33
    $region32: #{tpu_custom_call.1} parent=1 // pred_region
      %70 = dma.done [#allocation6], 1024
    $region33: #{tpu_custom_call.1} parent=1 // pred_fallthru
      _
    // Predicated region
    $region34: #{tpu_custom_call.1} parent=1 // pred_check
      _
    $region35: #{tpu_custom_call.1} parent=1 // pred_check_branch
      %72 = sbr.rel (0) target = $region37
    $region36: #{tpu_custom_call.1} parent=1 // pred_region
      %73 = dma.done [#allocation9], 1024
    $region37: #{tpu_custom_call.1} parent=1 // pred_fallthru
      _
    %v74 = vld [vmem:[#allocation2] sm:$0xff]
    %v75 = vld [vmem:[%s4] sm:$0x7]
    %v76 = vld [vmem:[#allocation5] sm:$0xff]
    %v77 = vld [vmem:[#allocation5 + $0x8] sm:$0xff]
    %v78 = vlaneseq
    %v79 = vshrl.u32 %v78, 7
    %v80 = vsub.s32 0, %v79
    %v81 = vrot.slane %v75, %v80
    %vm82 = vcmask 130048
    %v84 = vsel %vm82, %v74, 0
    %86 = vmatprep.subr.mxu0 0.0
    %87 = vmatpush1.msra.mxu0 %v76
    %88 = vmatprep.subr.mxu0 0.0
    %89 = vmatpush1.msra.mxu0 %v77
    %90 = vmatprep.subr.mxu0 0.0
    %91 = vmatpush1.msra.mxu0 0.0
    %92 = vmatprep.subr.mxu0 0.0
    %93 = vmatpush1.msra.mxu0 0.0
    %94 = vmatprep.subr.mxu0 0.0
    %95 = vmatpush1.msra.mxu0 0.0
    %96 = vmatprep.subr.mxu0 0.0
    %97 = vmatpush1.msra.mxu0 0.0
    %98 = vmatprep.subr.mxu0 0.0
    %99 = vmatpush1.msra.mxu0 0.0
    %100 = vmatprep.subr.mxu0 0.0
    %101 = vmatpush1.msra.mxu0 0.0
    %102 = vmatprep.subr.mxu0 0.0
    %103 = vmatpush1.msra.mxu0 0.0
    %104 = vmatprep.subr.mxu0 0.0
    %105 = vmatpush1.msra.mxu0 0.0
    %106 = vmatprep.subr.mxu0 0.0
    %107 = vmatpush1.msra.mxu0 0.0
    %108 = vmatprep.subr.mxu0 0.0
    %109 = vmatpush1.msra.mxu0 0.0
    %110 = vmatprep.subr.mxu0 0.0
    %111 = vmatpush1.msra.mxu0 0.0
    %112 = vmatprep.subr.mxu0 0.0
    %113 = vmatpush1.msra.mxu0 0.0
    %114 = vmatprep.subr.mxu0 0.0
    %115 = vmatpush1.msra.mxu0 0.0
    %116 = vmatprep.subr.mxu0 0.0
    %117 = vmatpush1.msra.mxu0 0.0
    %118 = vmatprep.subr.mxu0 0.0
    %119 = vmatpush1.msra.mxu0 0.0
    %120 = vmatprep.subr.mxu0 0.0
    %121 = vmatpush1.msra.mxu0 0.0
    %122 = vmatprep.subr.mxu0 0.0
    %123 = vmatpush1.msra.mxu0 0.0
    %124 = vmatprep.subr.mxu0 0.0
    %125 = vmatpush1.msra.mxu0 0.0
    %126 = vmatprep.subr.mxu0 0.0
    %127 = vmatpush1.msra.mxu0 0.0
    %128 = vmatprep.subr.mxu0 0.0
    %129 = vmatpush1.msra.mxu0 0.0
    %130 = vmatprep.subr.mxu0 0.0
    %131 = vmatpush1.msra.mxu0 0.0
    %132 = vmatprep.subr.mxu0 0.0
    %133 = vmatpush1.msra.mxu0 0.0
    %134 = vmatprep.subr.mxu0 0.0
    %135 = vmatpush1.msra.mxu0 0.0
    %136 = vmatprep.subr.mxu0 0.0
    %137 = vmatpush1.msra.mxu0 0.0
    %138 = vmatprep.subr.mxu0 0.0
    %139 = vmatpush1.msra.mxu0 0.0
    %140 = vmatprep.subr.mxu0 0.0
    %141 = vmatpush1.msra.mxu0 0.0
    %142 = vmatprep.subr.mxu0 0.0
    %143 = vmatpush1.msra.mxu0 0.0
    %144 = vmatprep.subr.mxu0 0.0
    %145 = vmatpush1.msra.mxu0 0.0
    %146 = vmatprep.subr.mxu0 0.0
    %147 = vmatpush1.msra.mxu0 0.0
    %148 = vmatprep.subr.mxu0 0.0
    %149 = vmatpush1.msra.mxu0 0.0
    %150 = vmatprep.mubr.f32.mxu0 0.0
    %151 = vmatmul.mubr.f32.gmra.mrb[0].mxu0 %v84
    %v152 = vpop.f32.mrb[0].mxu0
    %v153 = vadd.f32 %v81, %v152
    %v154 = vpop.f32.mrb[0].mxu0
    %155 = vdwg.mxu0
    %v156 = vmax.f32 %v153, 0.0
    %v157 = vld [vmem:[#allocation7] sm:$0xff]
    %v158 = vld [vmem:[#allocation7 + $0x8] sm:$0xff]
    %v159 = vld [vmem:[#allocation7 + $0x10] sm:$0xff]
    %v160 = vld [vmem:[#allocation7 + $0x18] sm:$0xff]
    %v161 = vld [vmem:[#allocation7 + $0x20] sm:$0xff]
    %v162 = vld [vmem:[#allocation7 + $0x28] sm:$0xff]
    %v163 = vld [vmem:[#allocation7 + $0x30] sm:$0xff]
    %v164 = vld [vmem:[#allocation7 + $0x38] sm:$0xff]
    %v165 = vlaneseq
    %v166 = vshrl.u32 %v165, 7
    %v167 = vsub.s32 1, %v166
    %v168 = vrot.slane %v75, %v167
    %vm169 = vcmask 523264
    %v171 = vsel %vm169, %v156, 0
    %173 = vmatprep.subr.mxu0 0.0
    %174 = vmatpush1.msra.mxu0 %v157
    %175 = vmatprep.subr.mxu0 0.0
    %176 = vmatpush1.msra.mxu0 %v158
    %177 = vmatprep.subr.mxu0 0.0
    %178 = vmatpush1.msra.mxu0 %v159
    %179 = vmatprep.subr.mxu0 0.0
    %180 = vmatpush1.msra.mxu0 %v160
    %181 = vmatprep.subr.mxu0 0.0
    %182 = vmatpush1.msra.mxu0 %v161
    %183 = vmatprep.subr.mxu0 0.0
    %184 = vmatpush1.msra.mxu0 %v162
    %185 = vmatprep.subr.mxu0 0.0
    %186 = vmatpush1.msra.mxu0 %v163
    %187 = vmatprep.subr.mxu0 0.0
    %188 = vmatpush1.msra.mxu0 %v164
    %189 = vmatprep.subr.mxu0 0.0
    %190 = vmatpush1.msra.mxu0 0.0
    %191 = vmatprep.subr.mxu0 0.0
    %192 = vmatpush1.msra.mxu0 0.0
    %193 = vmatprep.subr.mxu0 0.0
    %194 = vmatpush1.msra.mxu0 0.0
    %195 = vmatprep.subr.mxu0 0.0
    %196 = vmatpush1.msra.mxu0 0.0
    %197 = vmatprep.subr.mxu0 0.0
    %198 = vmatpush1.msra.mxu0 0.0
    %199 = vmatprep.subr.mxu0 0.0
    %200 = vmatpush1.msra.mxu0 0.0
    %201 = vmatprep.subr.mxu0 0.0
    %202 = vmatpush1.msra.mxu0 0.0
    %203 = vmatprep.subr.mxu0 0.0
    %204 = vmatpush1.msra.mxu0 0.0
    %205 = vmatprep.subr.mxu0 0.0
    %206 = vmatpush1.msra.mxu0 0.0
    %207 = vmatprep.subr.mxu0 0.0
    %208 = vmatpush1.msra.mxu0 0.0
    %209 = vmatprep.subr.mxu0 0.0
    %210 = vmatpush1.msra.mxu0 0.0
    %211 = vmatprep.subr.mxu0 0.0
    %212 = vmatpush1.msra.mxu0 0.0
    %213 = vmatprep.subr.mxu0 0.0
    %214 = vmatpush1.msra.mxu0 0.0
    %215 = vmatprep.subr.mxu0 0.0
    %216 = vmatpush1.msra.mxu0 0.0
    %217 = vmatprep.subr.mxu0 0.0
    %218 = vmatpush1.msra.mxu0 0.0
    %219 = vmatprep.subr.mxu0 0.0
    %220 = vmatpush1.msra.mxu0 0.0
    %221 = vmatprep.subr.mxu0 0.0
    %222 = vmatpush1.msra.mxu0 0.0
    %223 = vmatprep.subr.mxu0 0.0
    %224 = vmatpush1.msra.mxu0 0.0
    %225 = vmatprep.subr.mxu0 0.0
    %226 = vmatpush1.msra.mxu0 0.0
    %227 = vmatprep.subr.mxu0 0.0
    %228 = vmatpush1.msra.mxu0 0.0
    %229 = vmatprep.subr.mxu0 0.0
    %230 = vmatpush1.msra.mxu0 0.0
    %231 = vmatprep.subr.mxu0 0.0
    %232 = vmatpush1.msra.mxu0 0.0
    %233 = vmatprep.subr.mxu0 0.0
    %234 = vmatpush1.msra.mxu0 0.0
    %235 = vmatprep.subr.mxu0 0.0
    %236 = vmatpush1.msra.mxu0 0.0
    %237 = vmatprep.mubr.f32.mxu0 0.0
    %238 = vmatmul.mubr.f32.gmra.mrb[0].mxu0 %v171
    %v239 = vpop.f32.mrb[0].mxu0
    %v240 = vadd.f32 %v168, %v239
    %v241 = vpop.f32.mrb[0].mxu0
    %242 = vdwg.mxu0
    %v243 = vmax.f32 %v240, 0.0
    %v244 = vld [vmem:[#allocation8] sm:$0xff]
    %v245 = vld [vmem:[#allocation8 + $0x8] sm:$0xff]
    %v246 = vld [vmem:[#allocation8 + $0x10] sm:$0xff]
    %v247 = vld [vmem:[#allocation8 + $0x18] sm:$0xff]
    %v248 = vld [vmem:[#allocation8 + $0x20] sm:$0xff]
    %v249 = vld [vmem:[#allocation8 + $0x28] sm:$0xff]
    %v250 = vld [vmem:[#allocation8 + $0x30] sm:$0xff]
    %v251 = vld [vmem:[#allocation8 + $0x38] sm:$0xff]
    %v252 = vlaneseq
    %v253 = vshrl.u32 %v252, 7
    %v254 = vsub.s32 2, %v253
    %v255 = vrot.slane %v75, %v254
    %v257 = vsel %vm169, %v243, 0
    %259 = vmatprep.subr.mxu0 0.0
    %260 = vmatpush1.msra.mxu0 %v244
    %261 = vmatprep.subr.mxu0 0.0
    %262 = vmatpush1.msra.mxu0 %v245
    %263 = vmatprep.subr.mxu0 0.0
    %264 = vmatpush1.msra.mxu0 %v246
    %265 = vmatprep.subr.mxu0 0.0
    %266 = vmatpush1.msra.mxu0 %v247
    %267 = vmatprep.subr.mxu0 0.0
    %268 = vmatpush1.msra.mxu0 %v248
    %269 = vmatprep.subr.mxu0 0.0
    %270 = vmatpush1.msra.mxu0 %v249
    %271 = vmatprep.subr.mxu0 0.0
    %272 = vmatpush1.msra.mxu0 %v250
    %273 = vmatprep.subr.mxu0 0.0
    %274 = vmatpush1.msra.mxu0 %v251
    %275 = vmatprep.subr.mxu0 0.0
    %276 = vmatpush1.msra.mxu0 0.0
    %277 = vmatprep.subr.mxu0 0.0
    %278 = vmatpush1.msra.mxu0 0.0
    %279 = vmatprep.subr.mxu0 0.0
    %280 = vmatpush1.msra.mxu0 0.0
    %281 = vmatprep.subr.mxu0 0.0
    %282 = vmatpush1.msra.mxu0 0.0
    %283 = vmatprep.subr.mxu0 0.0
    %284 = vmatpush1.msra.mxu0 0.0
    %285 = vmatprep.subr.mxu0 0.0
    %286 = vmatpush1.msra.mxu0 0.0
    %287 = vmatprep.subr.mxu0 0.0
    %288 = vmatpush1.msra.mxu0 0.0
    %289 = vmatprep.subr.mxu0 0.0
    %290 = vmatpush1.msra.mxu0 0.0
    %291 = vmatprep.subr.mxu0 0.0
    %292 = vmatpush1.msra.mxu0 0.0
    %293 = vmatprep.subr.mxu0 0.0
    %294 = vmatpush1.msra.mxu0 0.0
    %295 = vmatprep.subr.mxu0 0.0
    %296 = vmatpush1.msra.mxu0 0.0
    %297 = vmatprep.subr.mxu0 0.0
    %298 = vmatpush1.msra.mxu0 0.0
    %299 = vmatprep.subr.mxu0 0.0
    %300 = vmatpush1.msra.mxu0 0.0
    %301 = vmatprep.subr.mxu0 0.0
    %302 = vmatpush1.msra.mxu0 0.0
    %303 = vmatprep.subr.mxu0 0.0
    %304 = vmatpush1.msra.mxu0 0.0
    %305 = vmatprep.subr.mxu0 0.0
    %306 = vmatpush1.msra.mxu0 0.0
    %307 = vmatprep.subr.mxu0 0.0
    %308 = vmatpush1.msra.mxu0 0.0
    %309 = vmatprep.subr.mxu0 0.0
    %310 = vmatpush1.msra.mxu0 0.0
    %311 = vmatprep.subr.mxu0 0.0
    %312 = vmatpush1.msra.mxu0 0.0
    %313 = vmatprep.subr.mxu0 0.0
    %314 = vmatpush1.msra.mxu0 0.0
    %315 = vmatprep.subr.mxu0 0.0
    %316 = vmatpush1.msra.mxu0 0.0
    %317 = vmatprep.subr.mxu0 0.0
    %318 = vmatpush1.msra.mxu0 0.0
    %319 = vmatprep.subr.mxu0 0.0
    %320 = vmatpush1.msra.mxu0 0.0
    %321 = vmatprep.subr.mxu0 0.0
    %322 = vmatpush1.msra.mxu0 0.0
    %323 = vmatprep.mubr.f32.mxu0 0.0
    %324 = vmatmul.mubr.f32.gmra.mrb[0].mxu0 %v257
    %v325 = vpop.f32.mrb[0].mxu0
    %v326 = vadd.f32 %v255, %v325
    %v327 = vpop.f32.mrb[0].mxu0
    %328 = vdwg.mxu0
    %v329 = vlaneseq
    %v330 = vand.u32 %v329, 127
    %v331 = vtanh.pop %v326
    %v332 = vmax.f32 %v326, 0.0
    %v333 = vand.u32 2147483647, %v326
    %v334 = vsub.f32 0.0, %v333
    %v335 = vmul.f32 %v334, 1.442695
    %v336 = vpow.pop %v335
    %v337 = vadd.f32 %v336, 1.0
    %v338 = vlog2.pop %v337
    %v339 = vmul.f32 %v338, 0.6931472
    %v340 = vmul.f32 -0.5, %v336
    %v341 = vadd.f32 %v340, 1.0
    %v342 = vmul.f32 %v341, %v336
    %v343 = vand.u32 2147483647, %v336
    %vm344 = vcmp.lt.f32.partialorder %v343, 0.0004427343
    %v345 = vsel %vm344, %v342, %v339
    %v346 = vadd.f32 %v332, %v345
    %vm347 = vcmp.lt.s32.totalorder %v330, 4
    %v348 = vsel %vm347, %v331, %v346
    %349 = vst [vmem:[#allocation10] sm:$0xff] %v348
    // Predicated region
    $region38: #{tpu_custom_call.1} parent=1 // pred_check
      _
    $region39: #{tpu_custom_call.1} parent=1 // pred_check_branch
      %351 = sbr.rel (0) target = $region41
    $region40: #{tpu_custom_call.1} parent=1 // pred_region
      %s353 = ssub.s32 128, 128
      %354 = vsyncadd [#allocation4], %s353
      %s356 = sshll.u32 [#allocation10], 4
      %s357 = int_to_ptr.vmem [resolvable:$true] %s356
      %359 = dma.vmem_to_hbm [thread:$0]  %s357, 128, %s5, [#allocation4]
    $region41: #{tpu_custom_call.1} parent=1 // pred_fallthru
      _
    // Predicated region
    $region42: #{tpu_custom_call.1} parent=1 // pred_check
      _
    $region43: #{tpu_custom_call.1} parent=1 // pred_check_branch
      %361 = sbr.rel (0) target = $region45
    $region44: #{tpu_custom_call.1} parent=1 // pred_region
      %362 = dma.done [#allocation4], 128
    $region45: #{tpu_custom_call.1} parent=1 // pred_fallthru
      _
    %363 = vsyncpa [#allocation3], 1
    %364 = vsyncpa [#allocation6], 1
    %365 = vsyncpa [#allocation9], 1
    %366 = vsyncpa [#allocation4], 1

</llo_original>
